<compile_context>
chip_gen: v5e
topology: v5e:2x2
jax: 0.10.0
libtpu: 0.0.40
codegen_flags: <defaults>
</compile_context>

<pallas_src>
import functools

import jax
import jax.numpy as jnp
from jax.experimental import pallas as pl
from jax.experimental.pallas import tpu as pltpu


def _round_up(x: int, m: int) -> int:
    return (x + m - 1) // m * m


def _tensorcores_per_chip() -> int:
    """Heuristic: chips with 2 TensorCores sharing HBM (v4 / v5p / v7x)."""
    try:
        kind = jax.devices()[0].device_kind.lower()
    except Exception:
        return 1
    return 2 if ("v4" in kind or "v5p" in kind or "7" in kind) else 1


def rnn_block_kernel(x_ref, wi_ref, wh_ref, b_ref, out_ref, xwi_ref, h_ref, *,
                     unroll):
    """Processes one (t_block, bb) tile of timesteps.

    x_ref  : (t_block, bb, din_p)   input slab (param dtype, e.g. bf16)
    wi_ref : (din_p, dlat_p)        Wi^T, whole array resident in VMEM
    wh_ref : (dlat_p, dlat_p)       Wh^T, whole array resident in VMEM
    b_ref  : (1, dlat_p)            hidden bias (f32)
    out_ref: (t_block, bb, dlat_p)  stacked hidden states
    xwi_ref: (t_block, bb, dlat_p)  f32 scratch: hoisted x@Wi + b
    h_ref  : (bb, dlat_p)           f32 scratch: hidden state carried across time blocks
    """
    t_blk = pl.program_id(1)

    # h_0 = zeros at the start of the sequence (per batch block).
    @pl.when(t_blk == 0)
    def _():
        h_ref[...] = jnp.zeros_like(h_ref)

    t_block, bb, din = x_ref.shape
    dlat = out_ref.shape[-1]

    # Hoisted input projection: ONE (t_block*bb, din) @ (din, dlat) matmul per
    # grid step (M = t_block*bb -> good MXU occupancy), bias folded in once.
    x2d = x_ref[...].reshape(t_block * bb, din)
    xwi = jnp.dot(x2d, wi_ref[...], preferred_element_type=jnp.float32)
    xwi_ref[...] = (xwi + b_ref[...]).reshape(t_block, bb, dlat)

    wh = wh_ref[...]

    def step(t, h):
        # Serial chain is only h @ Wh (+ precomputed activation) and tanh.
        pre = xwi_ref[t] + jnp.dot(h.astype(wh.dtype), wh,
                                   preferred_element_type=jnp.float32)
        h_new = jnp.tanh(pre)                    # f32 elementwise (v5e-friendly)
        out_ref[t] = h_new.astype(out_ref.dtype)
        return h_new

    h_final = jax.lax.fori_loop(0, t_block, step, h_ref[...], unroll=unroll)
    h_ref[...] = h_final                         # carry to next time block


def rnn_forward(x, wi, wh, bh, *, t_block=None, out_dtype=jnp.float32,
                param_dtype=jnp.bfloat16,
                vmem_budget_bytes=24 * 1024 * 1024):
    """x: (seq, batch, dim_input); wi: (dim_latent, dim_input);
    wh: (dim_latent, dim_latent); bh: (dim_latent,).
    Returns (seq, batch, dim_latent) stacked hidden states."""
    seq, batch, dim_input = x.shape
    dim_latent = wi.shape[0]

    x_dtype = param_dtype
    x_bytes = jnp.dtype(x_dtype).itemsize
    out_bytes = jnp.dtype(out_dtype).itemsize
    p_bytes = jnp.dtype(param_dtype).itemsize

    # --- blocking ------------------------------------------------------------
    dlat_p = _round_up(dim_latent, 128)          # lane-dense hidden/output dim
    # Keep x near its natural width in HBM (no 8x read amplification from a
    # 128-pad); sublane granule only.
    granule = 16 if x_bytes == 2 else 8
    din_p = _round_up(dim_input, 8)

    # Batch block: >= 2 blocks on 2-TC chips so the "parallel" axis feeds both
    # TensorCores; otherwise a single block as large as possible (bigger M).
    n_cores = _tensorcores_per_chip()
    bb_full = _round_up(batch, granule)
    n_bblk = max(-(-batch // 128),
                 n_cores if bb_full >= 2 * granule * n_cores else 1)
    bb = _round_up(-(-batch // n_bblk), granule)
    batch_p = n_bblk * bb

    # Time block from a VMEM budget (double-buffered in/out slabs + scratch +
    # resident weights).  Small feature dims -> large t_block (amortize grid
    # overhead); large dims -> shrink to fit v7x's 64 MiB VMEM.
    din_vmem = _round_up(din_p, 128)             # VMEM lane padding of the x slab
    if t_block is None:
        per_t = bb * (2 * din_vmem * x_bytes + 2 * dlat_p * out_bytes
                      + dlat_p * 4)
        fixed = (bb * dlat_p * 4                              # h scratch
                 + (din_vmem + dlat_p) * dlat_p * p_bytes     # resident weights
                 + dlat_p * 4)                                # bias
        t_block = int(max(1, min((vmem_budget_bytes - fixed) // per_t, 256, seq)))
    else:
        t_block = int(max(1, min(t_block, seq)))
    if t_block > 8:
        t_block = (t_block // 8) * 8             # divisible by the unroll factor
    unroll = t_block if t_block <= 8 else 8
    seq_p = _round_up(seq, t_block)
    n_tblk = seq_p // t_block

    # --- operand prep (zero padding keeps padded lanes of h exactly 0) -------
    x_p = jnp.zeros((seq_p, batch_p, din_p), x_dtype)
    x_p = x_p.at[:seq, :batch, :dim_input].set(x.astype(x_dtype))

    wi_p = jnp.zeros((din_p, dlat_p), param_dtype)
    wi_p = wi_p.at[:dim_input, :dim_latent].set(wi.T.astype(param_dtype))
    wh_p = jnp.zeros((dlat_p, dlat_p), param_dtype)
    wh_p = wh_p.at[:dim_latent, :dim_latent].set(wh.T.astype(param_dtype))
    b_p = jnp.zeros((1, dlat_p), jnp.float32).at[0, :dim_latent].set(
        bh.astype(jnp.float32))

    vmem_est = (2 * t_block * bb * din_vmem * x_bytes
                + 2 * t_block * bb * dlat_p * out_bytes
                + t_block * bb * dlat_p * 4
                + bb * dlat_p * 4
                + (din_vmem + dlat_p) * dlat_p * p_bytes
                + dlat_p * 4)
    vmem_limit = int(min(128 * 1024 * 1024,
                         max(32 * 1024 * 1024, (vmem_est * 3) // 2)))

    kernel = functools.partial(rnn_block_kernel, unroll=unroll)

    out_p = pl.pallas_call(
        kernel,
        out_shape=jax.ShapeDtypeStruct((seq_p, batch_p, dlat_p), out_dtype),
        grid_spec=pltpu.PrefetchScalarGridSpec(
            num_scalar_prefetch=0,
            grid=(n_bblk, n_tblk),                       # time innermost (carries h)
            in_specs=[
                pl.BlockSpec((t_block, bb, din_p), lambda b, t: (t, b, 0)),
                # Constant operands: whole-array resident in VMEM, no
                # per-step pipelining / double-buffering waste.
                pl.BlockSpec(memory_space=pltpu.MemorySpace.VMEM),
                pl.BlockSpec(memory_space=pltpu.MemorySpace.VMEM),
                pl.BlockSpec(memory_space=pltpu.MemorySpace.VMEM),
            ],
            out_specs=pl.BlockSpec((t_block, bb, dlat_p), lambda b, t: (t, b, 0)),
            scratch_shapes=[
                pltpu.VMEM((t_block, bb, dlat_p), jnp.float32),  # hoisted x@Wi + b
                pltpu.VMEM((bb, dlat_p), jnp.float32),           # carried hidden state
            ],
        ),
        compiler_params=pltpu.CompilerParams(
            # batch blocks are independent (2-TC chips split them across cores);
            # the time-block axis carries the recurrence -> sequential.
            dimension_semantics=("parallel", "arbitrary"),
            vmem_limit_bytes=vmem_limit,
        ),
    )(x_p, wi_p, wh_p, b_p)

    return out_p[:seq, :batch, :dim_latent]


def rnn_forward_ref(x, wi, wh, bh):
    """Pure-JAX reference reproducing the PyTorch forward loop."""
    seq, batch, _ = x.shape
    dim_latent = wi.shape[0]
    h = jnp.zeros((batch, dim_latent), jnp.float32)
    outs = []
    for i in range(seq):
        h = jnp.tanh(x[i] @ wi.T + h @ wh.T + bh)
        outs.append(h)
    return jnp.stack(outs)


if __name__ == "__main__":
    # Small shapes consistent with the module's forward signature.
    seq_len, batch = 8, 2
    dim_input, dim_latent, dim_output = 16, 32, 10

    key = jax.random.PRNGKey(0)
    k_x, k_wi, k_wh, k_bh, k_wd, k_bd = jax.random.split(key, 6)

    x = jax.random.normal(k_x, (seq_len, batch, dim_input), jnp.float32)

    # Deterministic synthetic parameters (shapes match the nn.Linear layers).
    wi = 0.1 * jax.random.normal(k_wi, (dim_latent, dim_input), jnp.float32)   # lin_i.weight
    wh = 0.1 * jax.random.normal(k_wh, (dim_latent, dim_latent), jnp.float32)  # lin_h.weight
    bh = 0.1 * jax.random.normal(k_bh, (dim_latent,), jnp.float32)             # lin_h.bias
    # lin_d (decode) parameters exist in __init__ but forward() never uses them.
    wd = 0.1 * jax.random.normal(k_wd, (dim_output, dim_latent), jnp.float32)
    bd = 0.1 * jax.random.normal(k_bd, (dim_output,), jnp.float32)
    # TODO(synk): decode() is not part of forward(); it is a plain linear layer and
    # would be a separate trivial matmul kernel.

    ref = rnn_forward_ref(x, wi, wh, bh)

    # 1) f32 weights, explicit t_block=4 -> two time blocks, exercising the
    #    cross-grid-step hidden-state carry; tight tolerance.
    out_f32 = jax.block_until_ready(
        rnn_forward(x, wi, wh, bh, t_block=4, param_dtype=jnp.float32))
    assert out_f32.shape == (seq_len, batch, dim_latent)
    assert out_f32.dtype == jnp.float32
    err_f32 = float(jnp.max(jnp.abs(out_f32 - ref)))
    assert jnp.allclose(out_f32, ref, atol=1e-4, rtol=1e-4), err_f32

    # 2) Default path: bf16 weights / MXU operands, auto VMEM-budgeted t_block;
    #    f32 accumulation keeps error small but bf16 rounding needs a looser tol.
    out_bf16 = jax.block_until_ready(rnn_forward(x, wi, wh, bh))
    assert out_bf16.shape == (seq_len, batch, dim_latent)
    err_bf16 = float(jnp.max(jnp.abs(out_bf16 - ref)))
    assert jnp.allclose(out_bf16, ref, atol=3e-2, rtol=3e-2), err_bf16

    print("KERNEL_OK")
</pallas_src>

<mosaic_0001>
module attributes {stable_mosaic.version = 11 : i64} {
  func.func @rnn_block_kernel(%arg0: i32, %arg1: i32, %arg2: memref<4x8x16xf32, #tpu.memory_space<vmem>>, %arg3: memref<16x128xf32, #tpu.memory_space<vmem>>, %arg4: memref<128x128xf32, #tpu.memory_space<vmem>>, %arg5: memref<1x128xf32, #tpu.memory_space<vmem>>, %arg6: memref<4x8x128xf32, #tpu.memory_space<vmem>>, %arg7: memref<4x8x128xf32, #tpu.memory_space<vmem>>, %arg8: memref<8x128xf32, #tpu.memory_space<vmem>>) attributes {dimension_semantics = [#tpu.dimension_semantics<parallel>, #tpu.dimension_semantics<arbitrary>], iteration_bounds = array<i64: 1, 2>, scalar_prefetch = 0 : i64, scratch_operands = 2 : i64, tpu.core_type = #tpu.core_type<tc>, window_params = [{transform_indices = @transform_0, window_bounds = array<i64: 4, 8, 16>}, {pipeline_mode = #tpu.pipeline_mode<synchronous>, transform_indices = @transform_1, window_bounds = array<i64: 16, 128>}, {pipeline_mode = #tpu.pipeline_mode<synchronous>, transform_indices = @transform_2, window_bounds = array<i64: 128, 128>}, {pipeline_mode = #tpu.pipeline_mode<synchronous>, transform_indices = @transform_3, window_bounds = array<i64: 1, 128>}, {transform_indices = @transform_4, window_bounds = array<i64: 4, 8, 128>}]} {
    %c0_i32 = arith.constant 0 : i32
    %0 = arith.cmpi eq, %arg1, %c0_i32 : i32
    %1 = arith.extui %0 : i1 to i32
    %c0_i32_0 = arith.constant 0 : i32
    %2 = arith.cmpi ne, %1, %c0_i32_0 : i32
    scf.if %2 {
      %cst_37 = arith.constant 0.000000e+00 : f32
      %55 = vector.broadcast %cst_37 : f32 to vector<8x128xf32>
      %c0_38 = arith.constant 0 : index
      %c0_39 = arith.constant 0 : index
      %56 = vector.load %arg8[%c0_38, %c0_39] : memref<8x128xf32, #tpu.memory_space<vmem>>, vector<8x128xf32>
      tpu.vector_store %arg8[%c0_38, %c0_39], %55 {strides = array<i32>} : memref<8x128xf32, #tpu.memory_space<vmem>>, vector<8x128xf32>,
    } else {
    }
    %c0 = arith.constant 0 : index
    %c0_1 = arith.constant 0 : index
    %c0_2 = arith.constant 0 : index
    %3 = vector.load %arg2[%c0, %c0_1, %c0_2] : memref<4x8x16xf32, #tpu.memory_space<vmem>>, vector<4x8x16xf32>
    %4 = vector.shape_cast %3 : vector<4x8x16xf32> to vector<32x16xf32>
    %c0_3 = arith.constant 0 : index
    %c0_4 = arith.constant 0 : index
    %5 = vector.load %arg3[%c0_3, %c0_4] : memref<16x128xf32, #tpu.memory_space<vmem>>, vector<16x128xf32>
    %cst = arith.constant dense<0.000000e+00> : vector<32x128xf32>
    %6 = tpu.matmul %4, %5, %cst {dimension_numbers = #tpu.dot_dimension_numbers<[1], [0], [0], [1], [0, 0, 1, 1], [], []>} : vector<32x16xf32>, vector<16x128xf32>, vector<32x128xf32> -> vector<32x128xf32>
    %c0_5 = arith.constant 0 : index
    %c0_6 = arith.constant 0 : index
    %7 = vector.load %arg5[%c0_5, %c0_6] : memref<1x128xf32, #tpu.memory_space<vmem>>, vector<1x128xf32>
    %8 = vector.broadcast %7 : vector<1x128xf32> to vector<32x128xf32>
    %9 = arith.addf %6, %8 : vector<32x128xf32>
    %10 = vector.shape_cast %9 : vector<32x128xf32> to vector<4x8x128xf32>
    %c0_7 = arith.constant 0 : index
    %c0_8 = arith.constant 0 : index
    %c0_9 = arith.constant 0 : index
    %11 = vector.load %arg7[%c0_7, %c0_8, %c0_9] : memref<4x8x128xf32, #tpu.memory_space<vmem>>, vector<4x8x128xf32>
    tpu.vector_store %arg7[%c0_7, %c0_8, %c0_9], %10 {strides = array<i32>} : memref<4x8x128xf32, #tpu.memory_space<vmem>>, vector<4x8x128xf32>,
    %c0_10 = arith.constant 0 : index
    %c0_11 = arith.constant 0 : index
    %12 = vector.load %arg4[%c0_10, %c0_11] : memref<128x128xf32, #tpu.memory_space<vmem>>, vector<128x128xf32>
    %c0_12 = arith.constant 0 : index
    %c0_13 = arith.constant 0 : index
    %13 = vector.load %arg8[%c0_12, %c0_13] : memref<8x128xf32, #tpu.memory_space<vmem>>, vector<8x128xf32>
    %c0_i32_14 = arith.constant 0 : i32
    %14 = arith.index_cast %c0_i32_14 : i32 to index
    %c0_15 = arith.constant 0 : index
    %c0_16 = arith.constant 0 : index
    %15 = vector.load %arg7[%14, %c0_15, %c0_16] : memref<4x8x128xf32, #tpu.memory_space<vmem>>, vector<1x8x128xf32>
    %16 = vector.shape_cast %15 : vector<1x8x128xf32> to vector<8x128xf32>
    %cst_17 = arith.constant dense<0.000000e+00> : vector<8x128xf32>
    %17 = tpu.matmul %13, %12, %cst_17 {dimension_numbers = #tpu.dot_dimension_numbers<[1], [0], [0], [1], [0, 0, 1, 1], [], []>} : vector<8x128xf32>, vector<128x128xf32>, vector<8x128xf32> -> vector<8x128xf32>
    %18 = arith.addf %16, %17 : vector<8x128xf32>
    %19 = math.tanh %18 : vector<8x128xf32>
    %20 = arith.index_cast %c0_i32_14 : i32 to index
    %c0_18 = arith.constant 0 : index
    %c0_19 = arith.constant 0 : index
    %21 = vector.load %arg6[%20, %c0_18, %c0_19] : memref<4x8x128xf32, #tpu.memory_space<vmem>>, vector<1x8x128xf32>
    %22 = vector.shape_cast %21 : vector<1x8x128xf32> to vector<8x128xf32>
    %23 = vector.shape_cast %19 : vector<8x128xf32> to vector<1x8x128xf32>
    tpu.vector_store %arg6[%20, %c0_18, %c0_19], %23 {strides = array<i32>} : memref<4x8x128xf32, #tpu.memory_space<vmem>>, vector<1x8x128xf32>,
    %c1_i32 = arith.constant 1 : i32
    %24 = arith.index_cast %c1_i32 : i32 to index
    %c0_20 = arith.constant 0 : index
    %c0_21 = arith.constant 0 : index
    %25 = vector.load %arg7[%24, %c0_20, %c0_21] : memref<4x8x128xf32, #tpu.memory_space<vmem>>, vector<1x8x128xf32>
    %26 = vector.shape_cast %25 : vector<1x8x128xf32> to vector<8x128xf32>
    %cst_22 = arith.constant dense<0.000000e+00> : vector<8x128xf32>
    %27 = tpu.matmul %19, %12, %cst_22 {dimension_numbers = #tpu.dot_dimension_numbers<[1], [0], [0], [1], [0, 0, 1, 1], [], []>} : vector<8x128xf32>, vector<128x128xf32>, vector<8x128xf32> -> vector<8x128xf32>
    %28 = arith.addf %26, %27 : vector<8x128xf32>
    %29 = math.tanh %28 : vector<8x128xf32>
    %30 = arith.index_cast %c1_i32 : i32 to index
    %c0_23 = arith.constant 0 : index
    %c0_24 = arith.constant 0 : index
    %31 = vector.load %arg6[%30, %c0_23, %c0_24] : memref<4x8x128xf32, #tpu.memory_space<vmem>>, vector<1x8x128xf32>
    %32 = vector.shape_cast %31 : vector<1x8x128xf32> to vector<8x128xf32>
    %33 = vector.shape_cast %29 : vector<8x128xf32> to vector<1x8x128xf32>
    tpu.vector_store %arg6[%30, %c0_23, %c0_24], %33 {strides = array<i32>} : memref<4x8x128xf32, #tpu.memory_space<vmem>>, vector<1x8x128xf32>,
    %c2_i32 = arith.constant 2 : i32
    %34 = arith.index_cast %c2_i32 : i32 to index
    %c0_25 = arith.constant 0 : index
    %c0_26 = arith.constant 0 : index
    %35 = vector.load %arg7[%34, %c0_25, %c0_26] : memref<4x8x128xf32, #tpu.memory_space<vmem>>, vector<1x8x128xf32>
    %36 = vector.shape_cast %35 : vector<1x8x128xf32> to vector<8x128xf32>
    %cst_27 = arith.constant dense<0.000000e+00> : vector<8x128xf32>
    %37 = tpu.matmul %29, %12, %cst_27 {dimension_numbers = #tpu.dot_dimension_numbers<[1], [0], [0], [1], [0, 0, 1, 1], [], []>} : vector<8x128xf32>, vector<128x128xf32>, vector<8x128xf32> -> vector<8x128xf32>
    %38 = arith.addf %36, %37 : vector<8x128xf32>
    %39 = math.tanh %38 : vector<8x128xf32>
    %40 = arith.index_cast %c2_i32 : i32 to index
    %c0_28 = arith.constant 0 : index
    %c0_29 = arith.constant 0 : index
    %41 = vector.load %arg6[%40, %c0_28, %c0_29] : memref<4x8x128xf32, #tpu.memory_space<vmem>>, vector<1x8x128xf32>
    %42 = vector.shape_cast %41 : vector<1x8x128xf32> to vector<8x128xf32>
    %43 = vector.shape_cast %39 : vector<8x128xf32> to vector<1x8x128xf32>
    tpu.vector_store %arg6[%40, %c0_28, %c0_29], %43 {strides = array<i32>} : memref<4x8x128xf32, #tpu.memory_space<vmem>>, vector<1x8x128xf32>,
    %c3_i32 = arith.constant 3 : i32
    %44 = arith.index_cast %c3_i32 : i32 to index
    %c0_30 = arith.constant 0 : index
    %c0_31 = arith.constant 0 : index
    %45 = vector.load %arg7[%44, %c0_30, %c0_31] : memref<4x8x128xf32, #tpu.memory_space<vmem>>, vector<1x8x128xf32>
    %46 = vector.shape_cast %45 : vector<1x8x128xf32> to vector<8x128xf32>
    %cst_32 = arith.constant dense<0.000000e+00> : vector<8x128xf32>
    %47 = tpu.matmul %39, %12, %cst_32 {dimension_numbers = #tpu.dot_dimension_numbers<[1], [0], [0], [1], [0, 0, 1, 1], [], []>} : vector<8x128xf32>, vector<128x128xf32>, vector<8x128xf32> -> vector<8x128xf32>
    %48 = arith.addf %46, %47 : vector<8x128xf32>
    %49 = math.tanh %48 : vector<8x128xf32>
    %50 = arith.index_cast %c3_i32 : i32 to index
    %c0_33 = arith.constant 0 : index
    %c0_34 = arith.constant 0 : index
    %51 = vector.load %arg6[%50, %c0_33, %c0_34] : memref<4x8x128xf32, #tpu.memory_space<vmem>>, vector<1x8x128xf32>
    %52 = vector.shape_cast %51 : vector<1x8x128xf32> to vector<8x128xf32>
    %53 = vector.shape_cast %49 : vector<8x128xf32> to vector<1x8x128xf32>
    tpu.vector_store %arg6[%50, %c0_33, %c0_34], %53 {strides = array<i32>} : memref<4x8x128xf32, #tpu.memory_space<vmem>>, vector<1x8x128xf32>,
    %c4_i32 = arith.constant 4 : i32
    %c0_35 = arith.constant 0 : index
    %c0_36 = arith.constant 0 : index
    %54 = vector.load %arg8[%c0_35, %c0_36] : memref<8x128xf32, #tpu.memory_space<vmem>>, vector<8x128xf32>
    tpu.vector_store %arg8[%c0_35, %c0_36], %49 {strides = array<i32>} : memref<8x128xf32, #tpu.memory_space<vmem>>, vector<8x128xf32>,
    return
  }
  func.func @transform_0(%arg0: i32, %arg1: i32) -> (i32, i32, i32) {
    %c0_i32 = arith.constant 0 : i32
    %c0_i32_0 = arith.constant 0 : i32
    return %arg1, %arg0, %c0_i32 : i32, i32, i32
  }
  func.func @transform_1(%arg0: i32, %arg1: i32) -> (i32, i32) {
    %c0_i32 = arith.constant 0 : i32
    %c0_i32_0 = arith.constant 0 : i32
    %c0_i32_1 = arith.constant 0 : i32
    return %c0_i32, %c0_i32_0 : i32, i32
  }
  func.func @transform_2(%arg0: i32, %arg1: i32) -> (i32, i32) {
    %c0_i32 = arith.constant 0 : i32
    %c0_i32_0 = arith.constant 0 : i32
    %c0_i32_1 = arith.constant 0 : i32
    return %c0_i32, %c0_i32_0 : i32, i32
  }
  func.func @transform_3(%arg0: i32, %arg1: i32) -> (i32, i32) {
    %c0_i32 = arith.constant 0 : i32
    %c0_i32_0 = arith.constant 0 : i32
    %c0_i32_1 = arith.constant 0 : i32
    return %c0_i32, %c0_i32_0 : i32, i32
  }
  func.func @transform_4(%arg0: i32, %arg1: i32) -> (i32, i32, i32) {
    %c0_i32 = arith.constant 0 : i32
    %c0_i32_0 = arith.constant 0 : i32
    return %arg1, %arg0, %c0_i32 : i32, i32, i32
  }
}

</mosaic_0001>

<llo_original>
// kernel: tpu_custom_call.1
$region0: #{tpu_custom_call.1}
  #allocation0 [shape = 'u32[]', space=smem, size = 0x4, offset = 0x4, fixed_abs, tag = 'smem constant byte address 0x4 - core index']
  #allocation1 [shape = 'u32[72,128]{1,0:T(1,128)}', space=vmem, size = 0x9000, scoped, tag = 'internal scratch']
  #allocation2 [shape = 'f32[4,8,128]{2,1,0:T(8,128)}', space=vmem, size = 0x4000, scoped, tag = 'scratch operand']
  #allocation3 [shape = 'f32[8,128]{1,0:T(8,128)}', space=vmem, size = 0x1000, scoped, tag = 'scratch operand']
  %s0 = inlined_call_operand.hbm [shape: f32[8,8,16], index: 0, kind: input, shape index: {}]
  %s1 = inlined_call_operand.hbm [shape: f32[16,128], index: 1, kind: input, shape index: {}]
  %s2 = inlined_call_operand.hbm [shape: f32[128,128], index: 2, kind: input, shape index: {}]
  %s3 = inlined_call_operand.vmem [shape: f32[1,128], index: 3, kind: input, shape index: {}]
  %s4 = inlined_call_operand.hbm [shape: f32[8,8,128], index: 4, kind: output, shape index: {}]
  %s5 = sld [smem:[#allocation0]]
  $region65: #{tpu_custom_call.1} parent=0
    _
  %s7 = ssub.s32 1, %s5
  %s8 = scalar_select 0, %s7, %s5
  $region1: #{tpu_custom_call.1} parent=0
    #allocation4 [shape = 'u8[32768]{0}', space=vmem, size = 0x8000, scoped, tag = 'input window, operand 0']
    #allocation5 [shape = 's32[2]{0}', space=sflag, size = 0x8, scoped, tag = 'scoped memory for tpu_custom_call.1']
    #allocation6 [shape = 's32[2]{0}', space=sflag, size = 0x8, scoped, tag = 'scoped memory for tpu_custom_call.1']
    #allocation7 [shape = 'u8[8192]{0}', space=vmem, size = 0x2000, scoped, tag = 'input window, operand 1, single buffered']
    #allocation8 [shape = 's32[1]{0}', space=sflag, size = 0x4, scoped, tag = 'scoped memory for tpu_custom_call.1']
    #allocation9 [shape = 'u8[65536]{0}', space=vmem, size = 0x10000, scoped, tag = 'input window, operand 2, single buffered']
    #allocation10 [shape = 'u8[32768]{0}', space=vmem, size = 0x8000, scoped, tag = 'output window, operand 0']
    %9 = vsyncpa [#allocation5], 0
    %s10 = scalar_lea.sflag [#allocation5], 1
    %11 = vsyncpa %s10, 0
    %12 = vsyncpa [#allocation8], 0
    %13 = vsyncpa [#allocation6], 0
    %s14 = scalar_lea.sflag [#allocation6], 1
    %15 = vsyncpa %s14, 0
    loop: start=0, step=1, limit=4
    $region2: #{tpu_custom_call.1} parent=1 // loop_pre_header
      _
    $region3: #{tpu_custom_call.1} parent=1 // loop_header
      %s17 = sphi 0, %s21
      %p18 = scmp.ge.s32.totalorder %s17, 4
      %s24 = sphi 0, %s36
      %s25 = sphi 0, %s32
      %s26 = sphi 0, %s24
      %s27 = sphi 0, %s25
      %s28 = sphi 0, %s26
      %s29 = sphi 0, %s27
      %s41 = sphi 0, %s43
      %s44 = sphi 0, %s41
      %s45 = sphi 0, %s44
      %s61 = sphi 0, %s45
      %s65 = sphi 0, %s65
      %s67 = sphi 0, %s65
      %s68 = sphi 0, %s67
      %s82 = sphi 0, %s68
      %s86 = sphi 0, %s86
      %s88 = sphi 0, %s86
      %s89 = sphi 0, %s88
      %s103 = sphi 0, %s89
      %s107 = sphi 0, %s107
      %s109 = sphi 0, %s107
      %s110 = sphi 0, %s109
      %s124 = sphi 0, %s110
      %s132 = sphi 0, %s134
      %s135 = sphi 0, %s132
      %s136 = sphi 0, %s135
      %s152 = sphi 0, %s136
    $region4: #{tpu_custom_call.1} parent=1 // loop_header_branch
      %20 = sbr.rel (%p18) target = $region8
    $region5: #{tpu_custom_call.1} parent=1 // loop_body
      %s22 = ssub.s32 %s17, 1
      %s23 = ssub.s32 %s17, 2
      %s30 = sadd.s32 1, %s25
      %p31 = scmp.ge.s32.totalorder %s30, 2
      %s32 = scalar_select %p31, 0, %s30
      %s33 = sadd.s32 1, %s24
      %s34 = scalar_select %p31, %s33, %s24
      %p35 = scmp.ge.s32.totalorder %s34, 1
      %s36 = scalar_select %p35, 0, %s34
      %s37 = ssub.s32 %s25, %s32
      %s38 = ssub.s32 %s24, %s36
      %s39 = sor.u32 %s37, %s38
      %p40 = scmp.eq.s32.totalorder %s39, 0
      %s42 = sadd.s32 %s41, 1
      %s43 = scalar_select %p40, %s41, %s42
      %p46 = pneg %p40
      %p47 = scmp.eq.s32.totalorder %s17, 1
      %p48 = por %p46, %p47
      %p49 = scmp.ne.s32.totalorder %s41, %s44
      %p50 = scmp.eq.s32.totalorder %s17, 0
      %p51 = por %p49, %p50
      %p52 = scmp.ne.s32.totalorder %s41, %s44
      %p53 = scmp.eq.s32.totalorder %s22, 1
      %p54 = por %p52, %p53
      %p55 = scmp.ne.s32.totalorder %s44, %s45
      %p56 = scmp.eq.s32.totalorder %s22, 0
      %p57 = por %p55, %p56
      %p58 = scmp.ne.s32.totalorder %s44, %s45
      %p59 = scmp.eq.s32.totalorder %s23, 1
      %p60 = por %p58, %p59
      %p62 = scmp.ne.s32.totalorder %s45, %s61
      %p63 = scmp.eq.s32.totalorder %s23, 0
      %p64 = por %p62, %p63
      %s66 = sadd.s32 %s65, 1
      %p69 = scmp.eq.s32.totalorder %s17, 1
      %p70 = scmp.ne.s32.totalorder %s65, %s67
      %p71 = scmp.eq.s32.totalorder %s17, 0
      %p72 = por %p70, %p71
      %p73 = scmp.ne.s32.totalorder %s65, %s67
      %p74 = scmp.eq.s32.totalorder %s22, 1
      %p75 = por %p73, %p74
      %p76 = scmp.ne.s32.totalorder %s67, %s68
      %p77 = scmp.eq.s32.totalorder %s22, 0
      %p78 = por %p76, %p77
      %p79 = scmp.ne.s32.totalorder %s67, %s68
      %p80 = scmp.eq.s32.totalorder %s23, 1
      %p81 = por %p79, %p80
      %p83 = scmp.ne.s32.totalorder %s68, %s82
      %p84 = scmp.eq.s32.totalorder %s23, 0
      %p85 = por %p83, %p84
      %s87 = sadd.s32 %s86, 1
      %p90 = scmp.eq.s32.totalorder %s17, 1
      %p91 = scmp.ne.s32.totalorder %s86, %s88
      %p92 = scmp.eq.s32.totalorder %s17, 0
      %p93 = por %p91, %p92
      %p94 = scmp.ne.s32.totalorder %s86, %s88
      %p95 = scmp.eq.s32.totalorder %s22, 1
      %p96 = por %p94, %p95
      %p97 = scmp.ne.s32.totalorder %s88, %s89
      %p98 = scmp.eq.s32.totalorder %s22, 0
      %p99 = por %p97, %p98
      %p100 = scmp.ne.s32.totalorder %s88, %s89
      %p101 = scmp.eq.s32.totalorder %s23, 1
      %p102 = por %p100, %p101
      %p104 = scmp.ne.s32.totalorder %s89, %s103
      %p105 = scmp.eq.s32.totalorder %s23, 0
      %p106 = por %p104, %p105
      %s108 = sadd.s32 %s107, 1
      %p111 = scmp.eq.s32.totalorder %s17, 1
      %p112 = scmp.ne.s32.totalorder %s107, %s109
      %p113 = scmp.eq.s32.totalorder %s17, 0
      %p114 = por %p112, %p113
      %p115 = scmp.ne.s32.totalorder %s107, %s109
      %p116 = scmp.eq.s32.totalorder %s22, 1
      %p117 = por %p115, %p116
      %p118 = scmp.ne.s32.totalorder %s109, %s110
      %p119 = scmp.eq.s32.totalorder %s22, 0
      %p120 = por %p118, %p119
      %p121 = scmp.ne.s32.totalorder %s109, %s110
      %p122 = scmp.eq.s32.totalorder %s23, 1
      %p123 = por %p121, %p122
      %p125 = scmp.ne.s32.totalorder %s110, %s124
      %p126 = scmp.eq.s32.totalorder %s23, 0
      %p127 = por %p125, %p126
      %s128 = ssub.s32 %s25, %s32
      %s129 = ssub.s32 %s24, %s36
      %s130 = sor.u32 %s128, %s129
      %p131 = scmp.eq.s32.totalorder %s130, 0
      %s133 = sadd.s32 %s132, 1
      %s134 = scalar_select %p131, %s132, %s133
      %p137 = pneg %p131
      %p138 = scmp.eq.s32.totalorder %s17, 1
      %p139 = por %p137, %p138
      %p140 = scmp.ne.s32.totalorder %s132, %s135
      %p141 = scmp.eq.s32.totalorder %s17, 0
      %p142 = por %p140, %p141
      %p143 = scmp.ne.s32.totalorder %s132, %s135
      %p144 = scmp.eq.s32.totalorder %s22, 1
      %p145 = por %p143, %p144
      %p146 = scmp.ne.s32.totalorder %s135, %s136
      %p147 = scmp.eq.s32.totalorder %s22, 0
      %p148 = por %p146, %p147
      %p149 = scmp.ne.s32.totalorder %s135, %s136
      %p150 = scmp.eq.s32.totalorder %s23, 1
      %p151 = por %p149, %p150
      %p153 = scmp.ne.s32.totalorder %s136, %s152
      %p154 = scmp.eq.s32.totalorder %s23, 0
      %p155 = por %p153, %p154
      %p156 = scmp.le.s32.totalorder 1, %s17
      %p157 = scmp.lt.s32.totalorder %s17, 3
      %p158 = pnand %p156, %p157
      %p159 = pneg %p158
      // Predicated region
      $region9: #{tpu_custom_call.1} parent=5 // pred_check
        _
      $region10: #{tpu_custom_call.1} parent=5 // pred_check_branch
        %161 = sbr.rel (%p158) target = $region12
      $region11: #{tpu_custom_call.1} parent=5 // pred_region
        %s162 = ssub.s32 %s17, 1
        // Predicated region
        $region13: #{tpu_custom_call.1} parent=11 // pred_check
          %p163 = pneg %p78
        $region14: #{tpu_custom_call.1} parent=11 // pred_check_branch
          %165 = sbr.rel (%p163) target = $region16
        $region15: #{tpu_custom_call.1} parent=11 // pred_region
          %167 = vsyncadd [#allocation8], 0
          %s168 = sshll.u32 %s1, 4
          %s169 = int_to_ptr.hbm [resolvable:$true] %s168
          %s170 = sshll.u32 [#allocation7], 4
          %s171 = int_to_ptr.vmem [resolvable:$true] %s170
          %176 = dma.hbm_to_vmem [thread:$0]  %s169, 256, %s171, [#allocation8], 128, 128, 8
        $region16: #{tpu_custom_call.1} parent=11 // pred_fallthru
          _
        // Predicated region
        $region17: #{tpu_custom_call.1} parent=11 // pred_check
          %p177 = pneg %p99
        $region18: #{tpu_custom_call.1} parent=11 // pred_check_branch
          %179 = sbr.rel (%p177) target = $region20
        $region19: #{tpu_custom_call.1} parent=11 // pred_region
          %181 = vsyncadd [#allocation8], 0
          %s182 = sshll.u32 %s2, 4
          %s183 = int_to_ptr.hbm [resolvable:$true] %s182
          %s184 = sshll.u32 [#allocation9], 4
          %s185 = int_to_ptr.vmem [resolvable:$true] %s184
          %190 = dma.hbm_to_vmem [thread:$0]  %s183, 2048, %s185, [#allocation8], 128, 128, 8
        $region20: #{tpu_custom_call.1} parent=11 // pred_fallthru
          _
        // Predicated region
        $region21: #{tpu_custom_call.1} parent=11 // pred_check
          %p191 = pneg %p120
        $region22: #{tpu_custom_call.1} parent=11 // pred_check_branch
          %193 = sbr.rel (%p191) target = $region24
        $region23: #{tpu_custom_call.1} parent=11 // pred_region
          _
        $region24: #{tpu_custom_call.1} parent=11 // pred_fallthru
          _
      $region12: #{tpu_custom_call.1} parent=5 // pred_fallthru
        _
      %p194 = scmp.lt.s32.totalorder %s17, 2
      // Predicated region
      $region25: #{tpu_custom_call.1} parent=5 // pred_check
        %p195 = pneg %p194
      $region26: #{tpu_custom_call.1} parent=5 // pred_check_branch
        %197 = sbr.rel (%p195) target = $region28
      $region27: #{tpu_custom_call.1} parent=5 // pred_region
        // Predicated region
        $region29: #{tpu_custom_call.1} parent=27 // pred_check
          %p198 = pneg %p51
        $region30: #{tpu_custom_call.1} parent=27 // pred_check_branch
          %200 = sbr.rel (%p198) target = $region32
        $region31: #{tpu_custom_call.1} parent=27 // pred_region
          %s201 = sand.u32 %s41, 1
          %s202 = scalar_lea.sflag [#allocation5], %s201
          %s203 = sand.u32 %s41, 1
          %s204 = smul.addr %s203, 32
          %s205 = scalar_lea.vmem [#allocation4], %s204
          %s206 = smul.u32 4, %s25
          %208 = vsyncadd %s202, 0
          %s209 = sadd.s32 %s24, %s206
          %s210 = smul.addr %s209, 8
          %s211 = scalar_lea.hbm %s0, %s210
          %s212 = sshll.u32 %s211, 4
          %s213 = int_to_ptr.hbm [resolvable:$true] %s212
          %s214 = sshll.u32 %s205, 4
          %s215 = int_to_ptr.vmem [resolvable:$true] %s214
          %220 = dma.hbm_to_vmem [thread:$0]  %s213, 512, %s215, %s202, 128, 128, 8
        $region32: #{tpu_custom_call.1} parent=27 // pred_fallthru
          _
      $region28: #{tpu_custom_call.1} parent=5 // pred_fallthru
        _
      %p221 = scmp.le.s32.totalorder 1, %s17
      %p222 = scmp.lt.s32.totalorder %s17, 3
      %p223 = pnand %p221, %p222
      %p224 = pneg %p223
      // Predicated region
      $region33: #{tpu_custom_call.1} parent=5 // pred_check
        _
      $region34: #{tpu_custom_call.1} parent=5 // pred_check_branch
        %226 = sbr.rel (%p223) target = $region36
      $region35: #{tpu_custom_call.1} parent=5 // pred_region
        %s227 = ssub.s32 %s17, 1
        %s228 = sand.u32 %s44, 1
        %s229 = scalar_lea.sflag [#allocation5], %s228
        %s230 = sand.u32 %s44, 1
        %s231 = smul.addr %s230, 32
        %s232 = scalar_lea.vmem [#allocation4], %s231
        // Predicated region
        $region37: #{tpu_custom_call.1} parent=35 // pred_check
          %p233 = pneg %p57
        $region38: #{tpu_custom_call.1} parent=35 // pred_check_branch
          %235 = sbr.rel (%p233) target = $region40
        $region39: #{tpu_custom_call.1} parent=35 // pred_region
          %237 = dma.done %s229, 512
        $region40: #{tpu_custom_call.1} parent=35 // pred_fallthru
          _
        // Predicated region
        $region41: #{tpu_custom_call.1} parent=35 // pred_check
          %p238 = pneg %p78
        $region42: #{tpu_custom_call.1} parent=35 // pred_check_branch
          %240 = sbr.rel (%p238) target = $region44
        $region43: #{tpu_custom_call.1} parent=35 // pred_region
          %242 = dma.done [#allocation8], 256
        $region44: #{tpu_custom_call.1} parent=35 // pred_fallthru
          _
        // Predicated region
        $region45: #{tpu_custom_call.1} parent=35 // pred_check
          %p243 = pneg %p99
        $region46: #{tpu_custom_call.1} parent=35 // pred_check_branch
          %245 = sbr.rel (%p243) target = $region48
        $region47: #{tpu_custom_call.1} parent=35 // pred_region
          %247 = dma.done [#allocation8], 2048
        $region48: #{tpu_custom_call.1} parent=35 // pred_fallthru
          _
        %s248 = sand.u32 %s44, 1
        %s249 = scalar_lea.sflag [#allocation5], %s248
        %s250 = sand.u32 %s44, 1
        %s251 = smul.addr %s250, 32
        %s252 = scalar_lea.vmem [#allocation4], %s251
        %p253 = pneg %p57
        %p254 = pneg %p54
        %p255 = pneg %p78
        %p256 = pneg %p75
        %p257 = pneg %p99
        %p258 = pneg %p96
        %p259 = pneg %p120
        %p260 = pneg %p117
        %p261 = pneg %p148
        %p262 = pneg %p145
        %s263 = sand.u32 %s135, 1
        %s264 = scalar_lea.sflag [#allocation6], %s263
        %s265 = sand.u32 %s135, 1
        %s266 = smul.addr %s265, 32
        %s267 = scalar_lea.vmem [#allocation10], %s266
        %s268 = smul.u32 4, %s27
        %s269 = smul.u32 4, %s27
        %p270 = scmp.eq.s32.totalorder %s27, 0
        // Predicated region
        $region49: #{tpu_custom_call.1} parent=35 // pred_check
          %p271 = pneg %p270
        $region50: #{tpu_custom_call.1} parent=35 // pred_check_branch
          %273 = sbr.rel (%p271) target = $region52
        $region51: #{tpu_custom_call.1} parent=35 // pred_region
          %274 = vst [vmem:[#allocation3] sm:$0xff] 0.0
        $region52: #{tpu_custom_call.1} parent=35 // pred_fallthru
          _
        %v275 = vld [vmem:[%s232] sm:$0xff]
        %v276 = vld [vmem:[%s232 + $0x8] sm:$0xff]
        %v277 = vld [vmem:[%s232 + $0x10] sm:$0xff]
        %v278 = vld [vmem:[%s232 + $0x18] sm:$0xff]
        %v279 = vld [vmem:[#allocation7] sm:$0xff]
        %v280 = vld [vmem:[#allocation7 + $0x8] sm:$0xff]
        %v281 = vld [vmem:[%s3] sm:$0x1]
        %v283 = vperm.slane %v281, 0
        %vm285 = vcmask 130048
        %v287 = vsel %vm285, %v275, 0
        %v290 = vsel %vm285, %v276, 0
        %v293 = vsel %vm285, %v277, 0
        %v296 = vsel %vm285, %v278, 0
        %298 = vmatpush.msra.mxu0 0.0
        %299 = vmatpush.msra.mxu0 0.0
        %300 = vmatpush.msra.mxu0 0.0
        %301 = vmatpush.msra.mxu0 0.0
        %302 = vmatpush.msra.mxu0 0.0
        %303 = vmatpush.msra.mxu0 0.0
        %304 = vmatpush.msra.mxu0 0.0
        %305 = vmatpush.msra.mxu0 0.0
        %306 = vmatpush.msra.mxu0 0.0
        %307 = vmatpush.msra.mxu0 0.0
        %308 = vmatpush.msra.mxu0 0.0
        %309 = vmatpush.msra.mxu0 0.0
        %310 = vmatpush.msra.mxu0 0.0
        %311 = vmatpush.msra.mxu0 0.0
        %312 = vmatpush.msra.mxu0 %v280
        %313 = vmatpush.msra.mxu0 %v279
        %314 = vmatmul.f32.gmra.mxu0 %v287
        %v315 = vpop.f32.mrf.mxu0
        %v316 = vadd.f32 %v283, %v315
        %317 = vmatmul.f32.gmra.mxu0 %v290
        %v318 = vpop.f32.mrf.mxu0
        %v319 = vadd.f32 %v283, %v318
        %320 = vmatmul.f32.gmra.mxu0 %v293
        %v321 = vpop.f32.mrf.mxu0
        %v322 = vadd.f32 %v283, %v321
        %323 = vmatmul.f32.gmra.mxu0 %v296
        %v324 = vpop.f32.mrf.mxu0
        %v325 = vadd.f32 %v283, %v324
        %326 = vdwg.mxu0
        %327 = vst [vmem:[#allocation2] sm:$0xff] %v316
        %328 = vst [vmem:[#allocation2 + $0x8] sm:$0xff] %v319
        %329 = vst [vmem:[#allocation2 + $0x10] sm:$0xff] %v322
        %330 = vst [vmem:[#allocation2 + $0x18] sm:$0xff] %v325
        %v331 = vld [vmem:[#allocation9] sm:$0xff]
        %v332 = vld [vmem:[#allocation9 + $0x8] sm:$0xff]
        %v333 = vld [vmem:[#allocation9 + $0x10] sm:$0xff]
        %v334 = vld [vmem:[#allocation9 + $0x18] sm:$0xff]
        %v335 = vld [vmem:[#allocation9 + $0x20] sm:$0xff]
        %v336 = vld [vmem:[#allocation9 + $0x28] sm:$0xff]
        %v337 = vld [vmem:[#allocation9 + $0x30] sm:$0xff]
        %v338 = vld [vmem:[#allocation9 + $0x38] sm:$0xff]
        %v339 = vld [vmem:[#allocation9 + $0x40] sm:$0xff]
        %v340 = vld [vmem:[#allocation9 + $0x48] sm:$0xff]
        %v341 = vld [vmem:[#allocation9 + $0x50] sm:$0xff]
        %v342 = vld [vmem:[#allocation9 + $0x58] sm:$0xff]
        %v343 = vld [vmem:[#allocation9 + $0x60] sm:$0xff]
        %v344 = vld [vmem:[#allocation9 + $0x68] sm:$0xff]
        %v345 = vld [vmem:[#allocation9 + $0x70] sm:$0xff]
        %v346 = vld [vmem:[#allocation9 + $0x78] sm:$0xff]
        %v347 = vld [vmem:[#allocation3] sm:$0xff]
        %v348 = vld [vmem:[#allocation2] sm:$0xff]
        %349 = vmatpush.msra.mxu0 %v346
        %350 = vmatpush.msra.mxu0 %v345
        %351 = vmatpush.msra.mxu0 %v344
        %352 = vmatpush.msra.mxu0 %v343
        %353 = vmatpush.msra.mxu0 %v342
        %354 = vmatpush.msra.mxu0 %v341
        %355 = vmatpush.msra.mxu0 %v340
        %356 = vmatpush.msra.mxu0 %v339
        %357 = vmatpush.msra.mxu0 %v338
        %358 = vmatpush.msra.mxu0 %v337
        %359 = vmatpush.msra.mxu0 %v336
        %360 = vmatpush.msra.mxu0 %v335
        %361 = vmatpush.msra.mxu0 %v334
        %362 = vmatpush.msra.mxu0 %v333
        %363 = vmatpush.msra.mxu0 %v332
        %364 = vmatpush.msra.mxu0 %v331
        %365 = vmatmul.f32.gmra.mxu0 %v347
        %v366 = vpop.f32.mrf.mxu0
        %v367 = vadd.f32 0.0, %v366
        %368 = vdwg.mxu0
        %v369 = vadd.f32 %v348, %v367
        %v370 = vtanh.pop %v369
        %371 = vst [vmem:[%s267] sm:$0xff] %v370
        %s372 = scalar_lea.vmem [#allocation2], 8
        %v373 = vld [vmem:[%s372] sm:$0xff]
        %374 = vmatpush.msra.mxu0 %v346
        %375 = vmatpush.msra.mxu0 %v345
        %376 = vmatpush.msra.mxu0 %v344
        %377 = vmatpush.msra.mxu0 %v343
        %378 = vmatpush.msra.mxu0 %v342
        %379 = vmatpush.msra.mxu0 %v341
        %380 = vmatpush.msra.mxu0 %v340
        %381 = vmatpush.msra.mxu0 %v339
        %382 = vmatpush.msra.mxu0 %v338
        %383 = vmatpush.msra.mxu0 %v337
        %384 = vmatpush.msra.mxu0 %v336
        %385 = vmatpush.msra.mxu0 %v335
        %386 = vmatpush.msra.mxu0 %v334
        %387 = vmatpush.msra.mxu0 %v333
        %388 = vmatpush.msra.mxu0 %v332
        %389 = vmatpush.msra.mxu0 %v331
        %390 = vmatmul.f32.gmra.mxu0 %v370
        %v391 = vpop.f32.mrf.mxu0
        %v392 = vadd.f32 0.0, %v391
        %393 = vdwg.mxu0
        %v394 = vadd.f32 %v373, %v392
        %v395 = vtanh.pop %v394
        %s396 = scalar_lea.vmem %s267, 8 [#allocation10]
        %397 = vst [vmem:[%s396] sm:$0xff] %v395
        %s398 = scalar_lea.vmem [#allocation2], 16
        %v399 = vld [vmem:[%s398] sm:$0xff]
        %400 = vmatpush.msra.mxu0 %v346
        %401 = vmatpush.msra.mxu0 %v345
        %402 = vmatpush.msra.mxu0 %v344
        %403 = vmatpush.msra.mxu0 %v343
        %404 = vmatpush.msra.mxu0 %v342
        %405 = vmatpush.msra.mxu0 %v341
        %406 = vmatpush.msra.mxu0 %v340
        %407 = vmatpush.msra.mxu0 %v339
        %408 = vmatpush.msra.mxu0 %v338
        %409 = vmatpush.msra.mxu0 %v337
        %410 = vmatpush.msra.mxu0 %v336
        %411 = vmatpush.msra.mxu0 %v335
        %412 = vmatpush.msra.mxu0 %v334
        %413 = vmatpush.msra.mxu0 %v333
        %414 = vmatpush.msra.mxu0 %v332
        %415 = vmatpush.msra.mxu0 %v331
        %416 = vmatmul.f32.gmra.mxu0 %v395
        %v417 = vpop.f32.mrf.mxu0
        %v418 = vadd.f32 0.0, %v417
        %419 = vdwg.mxu0
        %v420 = vadd.f32 %v399, %v418
        %v421 = vtanh.pop %v420
        %s422 = scalar_lea.vmem %s267, 16 [#allocation10]
        %423 = vst [vmem:[%s422] sm:$0xff] %v421
        %s424 = scalar_lea.vmem [#allocation2], 24
        %v425 = vld [vmem:[%s424] sm:$0xff]
        %426 = vmatpush.msra.mxu0 %v346
        %427 = vmatpush.msra.mxu0 %v345
        %428 = vmatpush.msra.mxu0 %v344
        %429 = vmatpush.msra.mxu0 %v343
        %430 = vmatpush.msra.mxu0 %v342
        %431 = vmatpush.msra.mxu0 %v341
        %432 = vmatpush.msra.mxu0 %v340
        %433 = vmatpush.msra.mxu0 %v339
        %434 = vmatpush.msra.mxu0 %v338
        %435 = vmatpush.msra.mxu0 %v337
        %436 = vmatpush.msra.mxu0 %v336
        %437 = vmatpush.msra.mxu0 %v335
        %438 = vmatpush.msra.mxu0 %v334
        %439 = vmatpush.msra.mxu0 %v333
        %440 = vmatpush.msra.mxu0 %v332
        %441 = vmatpush.msra.mxu0 %v331
        %442 = vmatmul.f32.gmra.mxu0 %v421
        %v443 = vpop.f32.mrf.mxu0
        %v444 = vadd.f32 0.0, %v443
        %445 = vdwg.mxu0
        %v446 = vadd.f32 %v425, %v444
        %v447 = vtanh.pop %v446
        %s448 = scalar_lea.vmem %s267, 24 [#allocation10]
        %449 = vst [vmem:[%s448] sm:$0xff] %v447
        %450 = vst [vmem:[#allocation3] sm:$0xff] %v447
        %s451 = sand.u32 %s135, 1
        %s452 = scalar_lea.sflag [#allocation6], %s451
        %s453 = sand.u32 %s135, 1
        %s454 = smul.addr %s453, 32
        %s455 = scalar_lea.vmem [#allocation10], %s454
        // Predicated region
        $region53: #{tpu_custom_call.1} parent=35 // pred_check
          %p456 = pneg %p145
        $region54: #{tpu_custom_call.1} parent=35 // pred_check_branch
          %458 = sbr.rel (%p456) target = $region56
        $region55: #{tpu_custom_call.1} parent=35 // pred_region
          %s459 = smul.u32 4, %s27
          %461 = vsyncadd %s452, 0
          %s462 = sadd.s32 %s26, %s459
          %s463 = smul.addr %s462, 8
          %s464 = scalar_lea.hbm %s4, %s463
          %s465 = sshll.u32 %s455, 4
          %s466 = int_to_ptr.vmem [resolvable:$true] %s465
          %s467 = sshll.u32 %s464, 4
          %s468 = int_to_ptr.hbm [resolvable:$true] %s467
          %473 = dma.vmem_to_hbm [thread:$0]  %s466, 512, %s468, %s452, 128, 128, 8
        $region56: #{tpu_custom_call.1} parent=35 // pred_fallthru
          _
      $region36: #{tpu_custom_call.1} parent=5 // pred_fallthru
        _
      %p474 = scmp.le.s32.totalorder 2, %s17
      // Predicated region
      $region57: #{tpu_custom_call.1} parent=5 // pred_check
        %p475 = pneg %p474
      $region58: #{tpu_custom_call.1} parent=5 // pred_check_branch
        %477 = sbr.rel (%p475) target = $region60
      $region59: #{tpu_custom_call.1} parent=5 // pred_region
        %s478 = ssub.s32 %s17, 2
        // Predicated region
        $region61: #{tpu_custom_call.1} parent=59 // pred_check
          %p479 = pneg %p151
        $region62: #{tpu_custom_call.1} parent=59 // pred_check_branch
          %481 = sbr.rel (%p479) target = $region64
        $region63: #{tpu_custom_call.1} parent=59 // pred_region
          %s482 = sand.u32 %s136, 1
          %s483 = scalar_lea.sflag [#allocation6], %s482
          %s484 = sand.u32 %s136, 1
          %s485 = smul.addr %s484, 32
          %s486 = scalar_lea.vmem [#allocation10], %s485
          %488 = dma.done %s483, 512
        $region64: #{tpu_custom_call.1} parent=59 // pred_fallthru
          _
      $region60: #{tpu_custom_call.1} parent=5 // pred_fallthru
        _
    $region6: #{tpu_custom_call.1} parent=1 // loop_footer
      %s21 = sadd.s32 1, %s17
    $region7: #{tpu_custom_call.1} parent=1 // loop_footer_branch
      %16 = sbr.rel target = $region3
    $region8: #{tpu_custom_call.1} parent=1 // loop_exit
      _
    %489 = vsyncpa [#allocation5], 1
    %s490 = scalar_lea.sflag [#allocation5], 1
    %491 = vsyncpa %s490, 1
    %492 = vsyncpa [#allocation8], 1
    %493 = vsyncpa [#allocation6], 1
    %s494 = scalar_lea.sflag [#allocation6], 1
    %495 = vsyncpa %s494, 1

</llo_original>
